<compile_context>
chip_gen: v5e
topology: v5e:2x2
jax: 0.10.0
libtpu: 0.0.40
codegen_flags: <defaults>
</compile_context>

<pallas_src>
import numpy as np
import jax
import jax.numpy as jnp
from jax.experimental import pallas as pl
from jax.experimental.pallas import tpu as pltpu


# --------------------------------------------------------------------------------------
# Kernel
# --------------------------------------------------------------------------------------
def _emb_bag_body(touched_ref, idx_ref, w_ref, tbl_ref, out_ref, *,
                  strip, n_batch_tiles, n_vocab_tiles):
    # touched_ref : SMEM int32 [T * n_batch_tiles * n_vocab_tiles] (scalar prefetch)
    # idx_ref     : (TG, TB, L) int32 (-1 padding)
    # w_ref       : (TG, TB, L) f32 or None (unweighted fast path)
    # tbl_ref     : (TG, TN, D) compute dtype
    # out_ref     : (TB, TG*D) f32 -- resident across the vocabulary grid axis
    g_idx = pl.program_id(0)
    b_idx = pl.program_id(1)
    n_idx = pl.program_id(2)
    TG, TB, L = idx_ref.shape
    _, TN, D = tbl_ref.shape
    n_strips = TN // strip

    # Initialize the resident output slab once per (table-group, batch-tile).
    @pl.when(n_idx == 0)
    def _():
        out_ref[...] = jnp.zeros_like(out_ref)

    n0 = n_idx * TN
    for g in range(TG):
        # Scalar-prefetched flag: does this (table, batch-tile, vocab-tile) contain any
        # bag index?  Untouched tiles skip the O(TB*TN*L) compares and the MXU dots.
        flat = ((g_idx * TG + g) * n_batch_tiles + b_idx) * n_vocab_tiles + n_idx
        t_flag = touched_ref[flat]

        @pl.when(t_flag > 0)
        def _(g=g):
            idx_g = idx_ref[g]                                   # (TB, L) int32
            w_g = None if w_ref is None else w_ref[g]            # (TB, L) f32
            acc_out = jnp.zeros((TB, D), jnp.float32)            # register-resident
            for s in range(n_strips):
                col = jax.lax.broadcasted_iota(jnp.int32, (TB, strip), 1) + (n0 + s * strip)
                # Register-resident (TB, strip) weighted one-hot accumulator; padding
                # idx == -1 never matches col, so no weight mask is needed.
                bag = jnp.zeros((TB, strip), jnp.float32)
                for l in range(L):
                    hit = idx_g[:, l:l + 1] == col
                    if w_g is None:
                        bag = bag + hit.astype(jnp.float32)
                    else:
                        bag = bag + jnp.where(hit, w_g[:, l:l + 1], 0.0)
                # One K=strip MXU pass per (table, strip); f32 accumulation.
                acc_out = acc_out + jnp.dot(
                    bag.astype(tbl_ref.dtype),
                    tbl_ref[g, s * strip:(s + 1) * strip, :],
                    preferred_element_type=jnp.float32)
            out_ref[:, g * D:(g + 1) * D] += acc_out


def _make_kernel(weighted, strip, n_batch_tiles, n_vocab_tiles):
    if weighted:
        def kernel(touched_ref, idx_ref, w_ref, tbl_ref, out_ref):
            _emb_bag_body(touched_ref, idx_ref, w_ref, tbl_ref, out_ref,
                          strip=strip, n_batch_tiles=n_batch_tiles,
                          n_vocab_tiles=n_vocab_tiles)
    else:
        def kernel(touched_ref, idx_ref, tbl_ref, out_ref):
            _emb_bag_body(touched_ref, idx_ref, None, tbl_ref, out_ref,
                          strip=strip, n_batch_tiles=n_batch_tiles,
                          n_vocab_tiles=n_vocab_tiles)
    return kernel


# --------------------------------------------------------------------------------------
# Tile heuristics (generation / VMEM aware)
# --------------------------------------------------------------------------------------
def _vmem_capacity_bytes():
    try:
        cap = getattr(pltpu.get_tpu_info(), "vmem_capacity_bytes", None)
        if cap:
            return int(cap)
    except Exception:
        pass
    return 64 << 20   # conservative floor (v7x physical VMEM per TensorCore)


def _pick_tiles(T, B, N, D, L, tbl_itemsize, weighted):
    phys = _vmem_capacity_bytes()
    budget = phys // 2                      # headroom for double-buffering + compiler scratch
    # Batch tile: MXU M rows / output sublanes; <=128, multiple of 8 (or == B).
    tb = B
    for cand in range(min(B, 128), 0, -1):
        if B % cand == 0 and (cand % 8 == 0 or cand == B):
            tb = cand
            break
    # Table group: largest divisor of T whose (tb, tg*D) f32 output slab fits ~1/3 of the
    # budget.  (Fixes the old `tg = T if T <= 8 else 1` cliff and keeps stores lane-dense.)
    tg = 1
    for cand in range(T, 0, -1):
        if T % cand == 0 and 2 * tb * cand * D * 4 <= budget // 3:
            tg = cand
            break
    out_bytes = 2 * tb * tg * D * 4
    idx_bytes = 2 * tg * tb * L * 4 * (2 if weighted else 1)
    tbl_budget = max(budget - out_bytes - idx_bytes, 1 << 20)
    # Vocab tile: largest multiple-of-128 divisor of N whose double-buffered slab fits.
    tn = None
    for cand in (2048, 1024, 512, 256, 128):
        if cand <= N and N % cand == 0 and 2 * tg * cand * D * tbl_itemsize <= tbl_budget:
            tn = cand
            break
    if tn is None:
        tn = 128 if (N % 128 == 0) else N
    return tb, tg, tn, phys


def _vmem_limit_bytes(tb, tg, tn, D, L, tbl_itemsize, weighted, phys):
    need = (2 * tg * tn * D * tbl_itemsize           # double-buffered table slab
            + 2 * tb * tg * D * 4                    # resident output slab + writeback
            + 2 * tg * tb * L * 4 * (2 if weighted else 1))
    want = int(need * 1.5) + (8 << 20)
    return int(min(int(phys * 0.9), max(32 << 20, want)))


def _touched_vocab_tiles(idx_dense, tb, tn, N):
    """int32 bitmap [T * (B//tb) * (N//tn)]: 1 iff that (table, batch-tile, vocab-tile)
    contains at least one non-padding bag index."""
    T, B, L = idx_dense.shape
    nb, nn = B // tb, N // tn
    tile_of = jnp.where(idx_dense >= 0, idx_dense // tn, -1).reshape(T, nb, tb * L)
    hits = tile_of[..., None] == jnp.arange(nn, dtype=jnp.int32)
    return hits.any(axis=2).reshape(-1).astype(jnp.int32)


# --------------------------------------------------------------------------------------
# Wrapper
# --------------------------------------------------------------------------------------
def batched_fused_embedding_lookup(idx_dense, w_dense, tables, *,
                                   tb=None, tn=None, tg=None,
                                   compute_dtype=jnp.bfloat16):
    """idx_dense [T,B,L] int32 (-1 padding), w_dense [T,B,L] f32 or None (unweighted),
    tables [T,N,D] f32  ->  pooled output [B, T*D] f32 (SUM pooling)."""
    T, B, L = idx_dense.shape
    Tt, N, D = tables.shape
    assert Tt == T
    weighted = w_dense is not None
    tbl_itemsize = jnp.dtype(compute_dtype).itemsize

    d_tb, d_tg, d_tn, phys = _pick_tiles(T, B, N, D, L, tbl_itemsize, weighted)
    tb = d_tb if tb is None else tb
    tg = d_tg if tg is None else tg
    tn = d_tn if tn is None else tn
    assert B % tb == 0 and T % tg == 0 and N % tn == 0
    assert (tb % 8 == 0) or (tb == B)
    assert (tn % 8 == 0) or (tn == N)
    strip = 128 if tn % 128 == 0 else tn

    # Pre-cast tables to the MXU operand dtype (halves table HBM/VMEM traffic for bf16);
    # the pooled-weight `bag` matrix is cast the same way, accumulation stays f32.
    tables_c = tables.astype(compute_dtype)
    n_batch_tiles, n_vocab_tiles = B // tb, N // tn
    touched = _touched_vocab_tiles(idx_dense, tb, tn, N)

    kernel = _make_kernel(weighted, strip, n_batch_tiles, n_vocab_tiles)
    in_specs = [pl.BlockSpec((tg, tb, L), lambda g, b, n, tmap: (g, b, 0))]
    operands = [idx_dense]
    if weighted:
        in_specs.append(pl.BlockSpec((tg, tb, L), lambda g, b, n, tmap: (g, b, 0)))
        operands.append(w_dense)
    in_specs.append(pl.BlockSpec((tg, tn, D), lambda g, b, n, tmap: (g, n, 0)))
    operands.append(tables_c)

    # TODO(synk): for production vocab sizes (N >> B*L) add a scalar-prefetch + manual
    # row-gather variant (table in memory_space=pl.ANY, double-buffered make_async_copy
    # per needed row) so per-feature HBM traffic is B*L*D instead of N*D.
    # TODO(synk): table slabs are re-DMA'd for every batch tile (grid order g,b,n); when
    # tg*N*D fits VMEM, cache the whole table group in scratch fetched once per group.
    # TODO(synk): a lane-dense [T,L,B] idx/w layout with a transposed dot_general would
    # remove the per-l lane broadcast; kept the (TB,L) layout for lowering robustness.
    return pl.pallas_call(
        kernel,
        out_shape=jax.ShapeDtypeStruct((B, T * D), jnp.float32),
        grid_spec=pltpu.PrefetchScalarGridSpec(
            num_scalar_prefetch=1,
            grid=(T // tg, n_batch_tiles, n_vocab_tiles),
            in_specs=in_specs,
            out_specs=pl.BlockSpec((tb, tg * D), lambda g, b, n, tmap: (b, g)),
        ),
        compiler_params=pltpu.CompilerParams(
            dimension_semantics=("parallel", "parallel", "arbitrary"),
            vmem_limit_bytes=_vmem_limit_bytes(tb, tg, tn, D, L, tbl_itemsize,
                                               weighted, phys)),
    )(touched, *operands)


# --------------------------------------------------------------------------------------
# Ragged -> dense glue and numpy reference
# --------------------------------------------------------------------------------------
def densify(values, offsets, weights, num_features, batch_size, max_len):
    """CSR (values, offsets[, weights]) -> dense [F,B,L] idx (-1 padded) / weights (0 padded).
    Offsets must be monotonic non-decreasing (fbgemm contract); validate host-side."""
    lengths = offsets[1:] - offsets[:-1]
    starts = offsets[:-1]
    l_iota = jnp.arange(max_len, dtype=jnp.int32)
    pos = starts[:, None] + l_iota[None, :]
    valid = l_iota[None, :] < lengths[:, None]
    pos_c = jnp.clip(pos, 0, max(values.shape[0] - 1, 0))
    idx_d = jnp.where(valid, values[pos_c], -1).astype(jnp.int32)   # -1 never matches a row id
    idx_d = idx_d.reshape(num_features, batch_size, max_len)
    if weights is None:
        return idx_d, None
    w_d = jnp.where(valid, weights.astype(jnp.float32)[pos_c], 0.0)
    return idx_d, w_d.reshape(num_features, batch_size, max_len).astype(jnp.float32)


def reference_forward(values, offsets, weights, tables, num_features, batch_size):
    """Plain-numpy reference of the fbgemm pooled (SUM) embedding-bag forward."""
    values = np.asarray(values)
    offsets = np.asarray(offsets)
    weights = (np.ones_like(values, dtype=np.float32) if weights is None
               else np.asarray(weights, dtype=np.float32))
    tables = np.asarray(tables)
    D = tables.shape[-1]
    out = np.zeros((batch_size, num_features * D), np.float32)
    for f in range(num_features):
        for b in range(batch_size):
            s, e = offsets[f * batch_size + b], offsets[f * batch_size + b + 1]
            for p in range(s, e):
                out[b, f * D:(f + 1) * D] += weights[p] * tables[f, values[p]]
    return out


if __name__ == "__main__":
    # Small deterministic config (4 single-feature tables) that still exercises multiple
    # grid steps on all three axes, multi-strip bag builds, empty bags and tile skipping.
    T = 4       # tables / features
    N = 256     # num_embeddings per table
    D = 128     # embedding_dim per table
    B = 8       # batch size
    L_MAX = 8   # max bag length after padding

    key = jax.random.PRNGKey(0)
    k_tbl, k_len, k_val, k_w = jax.random.split(key, 4)

    # _init_parameters(): uniform(-1/sqrt(N), 1/sqrt(N)) per table (torchrec default bounds).
    bound = 1.0 / np.sqrt(N)
    tables = jax.random.uniform(k_tbl, (T, N, D), jnp.float32, -bound, bound)

    # CSR inputs like the fbgemm forward expects (host-side cumsum -> static nnz).
    lengths = np.asarray(jax.random.randint(k_len, (T * B,), 0, L_MAX + 1))  # empty bags allowed
    offsets_np = np.concatenate([[0], np.cumsum(lengths)]).astype(np.int32)
    assert np.all(np.diff(offsets_np) >= 0), "offsets must be monotonic non-decreasing"
    nnz = int(offsets_np[-1])
    offsets = jnp.asarray(offsets_np)
    values = jax.random.randint(k_val, (nnz,), 0, N).astype(jnp.int32)
    weights = jax.random.uniform(k_w, (nnz,), jnp.float32, 0.5, 1.5)   # per-sample weights

    # ---- weighted path, f32 MXU operands (bit-faithful to the module's fp32 weights) ----
    idx_dense, w_dense = densify(values, offsets, weights, T, B, L_MAX)
    ref_w = reference_forward(values, offsets, weights, tables, T, B)
    out_w = batched_fused_embedding_lookup(
        idx_dense, w_dense, tables, tg=2, tn=128, compute_dtype=jnp.float32)
    out_w = jax.block_until_ready(out_w)
    np.testing.assert_allclose(np.asarray(out_w), ref_w, rtol=1e-5, atol=1e-5)

    # ---- unweighted fast path, bf16 MXU operands, auto (VMEM-aware) tiling ----
    idx_dense_u, _ = densify(values, offsets, None, T, B, L_MAX)
    ref_u = reference_forward(values, offsets, None, tables, T, B)
    out_u = batched_fused_embedding_lookup(idx_dense_u, None, tables)
    out_u = jax.block_until_ready(out_u)
    np.testing.assert_allclose(np.asarray(out_u), ref_u, rtol=2e-2, atol=1e-2)

    # TODO(synk): the fused optimizer (EmbeddingFusedOptimizer) and the backward/update
    # machinery of SplitTableBatchedEmbeddingBagsCodegen are training-time state with no
    # forward-pass equivalent; only the pooled-lookup forward is implemented here.
    print("KERNEL_OK")
</pallas_src>

<mosaic_0001>
module attributes {stable_mosaic.version = 11 : i64} {
  func.func @kernel(%arg0: i32, %arg1: i32, %arg2: i32, %arg3: memref<8xi32, #tpu.memory_space<smem>>, %arg4: memref<2x8x8xi32, #tpu.memory_space<vmem>>, %arg5: memref<2x8x8xf32, #tpu.memory_space<vmem>>, %arg6: memref<2x128x128xf32, #tpu.memory_space<vmem>>, %arg7: memref<8x256xf32, #tpu.memory_space<vmem>>) attributes {dimension_semantics = [#tpu.dimension_semantics<parallel>, #tpu.dimension_semantics<parallel>, #tpu.dimension_semantics<arbitrary>], iteration_bounds = array<i64: 2, 1, 2>, scalar_prefetch = 1 : i64, scratch_operands = 0 : i64, tpu.core_type = #tpu.core_type<tc>, window_params = [{transform_indices = @transform_0, window_bounds = array<i64: 2, 8, 8>}, {transform_indices = @transform_1, window_bounds = array<i64: 2, 8, 8>}, {transform_indices = @transform_2, window_bounds = array<i64: 2, 128, 128>}, {transform_indices = @transform_3, window_bounds = array<i64: 8, 256>}]} {
    %c0_i32 = arith.constant 0 : i32
    %0 = arith.cmpi eq, %arg2, %c0_i32 : i32
    %1 = arith.extui %0 : i1 to i32
    %c0_i32_0 = arith.constant 0 : i32
    %2 = arith.cmpi ne, %1, %c0_i32_0 : i32
    scf.if %2 {
      %cst = arith.constant 0.000000e+00 : f32
      %26 = vector.broadcast %cst : f32 to vector<8x256xf32>
      %c0 = arith.constant 0 : index
      %c0_11 = arith.constant 0 : index
      %27 = vector.load %arg7[%c0, %c0_11] : memref<8x256xf32, #tpu.memory_space<vmem>>, vector<8x256xf32>
      tpu.vector_store %arg7[%c0, %c0_11], %26 {strides = array<i32>} : memref<8x256xf32, #tpu.memory_space<vmem>>, vector<8x256xf32>,
    } else {
    }
    %c128_i32 = arith.constant 128 : i32
    %3 = arith.muli %arg2, %c128_i32 : i32
    %c2_i32 = arith.constant 2 : i32
    %4 = arith.muli %arg0, %c2_i32 : i32
    %c0_i32_1 = arith.constant 0 : i32
    %5 = arith.addi %4, %c0_i32_1 : i32
    %c1_i32 = arith.constant 1 : i32
    %6 = arith.muli %5, %c1_i32 : i32
    %7 = arith.addi %6, %arg1 : i32
    %c2_i32_2 = arith.constant 2 : i32
    %8 = arith.muli %7, %c2_i32_2 : i32
    %9 = arith.addi %8, %arg2 : i32
    %10 = arith.index_cast %9 : i32 to index
    %11 = memref.load %arg3[%10] : memref<8xi32, #tpu.memory_space<smem>>
    %c0_i32_3 = arith.constant 0 : i32
    %12 = arith.cmpi sgt, %11, %c0_i32_3 : i32
    %13 = arith.extui %12 : i1 to i32
    %c0_i32_4 = arith.constant 0 : i32
    %14 = arith.cmpi ne, %13, %c0_i32_4 : i32
    scf.if %14 {
      %c0 = arith.constant 0 : index
      %c0_11 = arith.constant 0 : index
      %c0_12 = arith.constant 0 : index
      %26 = vector.load %arg4[%c0, %c0_11, %c0_12] : memref<2x8x8xi32, #tpu.memory_space<vmem>>, vector<1x8x8xi32>
      %27 = vector.shape_cast %26 : vector<1x8x8xi32> to vector<8x8xi32>
      %c0_13 = arith.constant 0 : index
      %c0_14 = arith.constant 0 : index
      %c0_15 = arith.constant 0 : index
      %28 = vector.load %arg5[%c0_13, %c0_14, %c0_15] : memref<2x8x8xf32, #tpu.memory_space<vmem>>, vector<1x8x8xf32>
      %29 = vector.shape_cast %28 : vector<1x8x8xf32> to vector<8x8xf32>
      %cst = arith.constant 0.000000e+00 : f32
      %30 = vector.broadcast %cst : f32 to vector<8x128xf32>
      %31 = tpu.iota {dimensions = array<i32: 1>} : vector<8x128xi32>
      %c0_i32_16 = arith.constant 0 : i32
      %32 = arith.addi %3, %c0_i32_16 : i32
      %33 = vector.broadcast %32 : i32 to vector<8x128xi32>
      %34 = arith.addi %31, %33 : vector<8x128xi32>
      %cst_17 = arith.constant 0.000000e+00 : f32
      %35 = vector.broadcast %cst_17 : f32 to vector<8x128xf32>
      %36 = vector.extract_strided_slice %27 {offsets = [0, 0], sizes = [8, 1], strides = [1, 1]} : vector<8x8xi32> to vector<8x1xi32>
      %37 = vector.broadcast %36 : vector<8x1xi32> to vector<8x128xi32>
      %38 = arith.cmpi eq, %37, %34 : vector<8x128xi32>
      %39 = vector.extract_strided_slice %29 {offsets = [0, 0], sizes = [8, 1], strides = [1, 1]} : vector<8x8xf32> to vector<8x1xf32>
      %cst_18 = arith.constant 0.000000e+00 : f32
      %40 = vector.shape_cast %39 : vector<8x1xf32> to vector<8x1xf32>
      %41 = vector.broadcast %40 : vector<8x1xf32> to vector<8x128xf32>
      %42 = vector.broadcast %cst_18 : f32 to vector<8x128xf32>
      %43 = arith.select %38, %41, %42 : vector<8x128xi1>, vector<8x128xf32>
      %44 = arith.addf %35, %43 : vector<8x128xf32>
      %45 = vector.extract_strided_slice %27 {offsets = [0, 1], sizes = [8, 1], strides = [1, 1]} : vector<8x8xi32> to vector<8x1xi32>
      %46 = vector.broadcast %45 : vector<8x1xi32> to vector<8x128xi32>
      %47 = arith.cmpi eq, %46, %34 : vector<8x128xi32>
      %48 = vector.extract_strided_slice %29 {offsets = [0, 1], sizes = [8, 1], strides = [1, 1]} : vector<8x8xf32> to vector<8x1xf32>
      %cst_19 = arith.constant 0.000000e+00 : f32
      %49 = vector.shape_cast %48 : vector<8x1xf32> to vector<8x1xf32>
      %50 = vector.broadcast %49 : vector<8x1xf32> to vector<8x128xf32>
      %51 = vector.broadcast %cst_19 : f32 to vector<8x128xf32>
      %52 = arith.select %47, %50, %51 : vector<8x128xi1>, vector<8x128xf32>
      %53 = arith.addf %44, %52 : vector<8x128xf32>
      %54 = vector.extract_strided_slice %27 {offsets = [0, 2], sizes = [8, 1], strides = [1, 1]} : vector<8x8xi32> to vector<8x1xi32>
      %55 = vector.broadcast %54 : vector<8x1xi32> to vector<8x128xi32>
      %56 = arith.cmpi eq, %55, %34 : vector<8x128xi32>
      %57 = vector.extract_strided_slice %29 {offsets = [0, 2], sizes = [8, 1], strides = [1, 1]} : vector<8x8xf32> to vector<8x1xf32>
      %cst_20 = arith.constant 0.000000e+00 : f32
      %58 = vector.shape_cast %57 : vector<8x1xf32> to vector<8x1xf32>
      %59 = vector.broadcast %58 : vector<8x1xf32> to vector<8x128xf32>
      %60 = vector.broadcast %cst_20 : f32 to vector<8x128xf32>
      %61 = arith.select %56, %59, %60 : vector<8x128xi1>, vector<8x128xf32>
      %62 = arith.addf %53, %61 : vector<8x128xf32>
      %63 = vector.extract_strided_slice %27 {offsets = [0, 3], sizes = [8, 1], strides = [1, 1]} : vector<8x8xi32> to vector<8x1xi32>
      %64 = vector.broadcast %63 : vector<8x1xi32> to vector<8x128xi32>
      %65 = arith.cmpi eq, %64, %34 : vector<8x128xi32>
      %66 = vector.extract_strided_slice %29 {offsets = [0, 3], sizes = [8, 1], strides = [1, 1]} : vector<8x8xf32> to vector<8x1xf32>
      %cst_21 = arith.constant 0.000000e+00 : f32
      %67 = vector.shape_cast %66 : vector<8x1xf32> to vector<8x1xf32>
      %68 = vector.broadcast %67 : vector<8x1xf32> to vector<8x128xf32>
      %69 = vector.broadcast %cst_21 : f32 to vector<8x128xf32>
      %70 = arith.select %65, %68, %69 : vector<8x128xi1>, vector<8x128xf32>
      %71 = arith.addf %62, %70 : vector<8x128xf32>
      %72 = vector.extract_strided_slice %27 {offsets = [0, 4], sizes = [8, 1], strides = [1, 1]} : vector<8x8xi32> to vector<8x1xi32>
      %73 = vector.broadcast %72 : vector<8x1xi32> to vector<8x128xi32>
      %74 = arith.cmpi eq, %73, %34 : vector<8x128xi32>
      %75 = vector.extract_strided_slice %29 {offsets = [0, 4], sizes = [8, 1], strides = [1, 1]} : vector<8x8xf32> to vector<8x1xf32>
      %cst_22 = arith.constant 0.000000e+00 : f32
      %76 = vector.shape_cast %75 : vector<8x1xf32> to vector<8x1xf32>
      %77 = vector.broadcast %76 : vector<8x1xf32> to vector<8x128xf32>
      %78 = vector.broadcast %cst_22 : f32 to vector<8x128xf32>
      %79 = arith.select %74, %77, %78 : vector<8x128xi1>, vector<8x128xf32>
      %80 = arith.addf %71, %79 : vector<8x128xf32>
      %81 = vector.extract_strided_slice %27 {offsets = [0, 5], sizes = [8, 1], strides = [1, 1]} : vector<8x8xi32> to vector<8x1xi32>
      %82 = vector.broadcast %81 : vector<8x1xi32> to vector<8x128xi32>
      %83 = arith.cmpi eq, %82, %34 : vector<8x128xi32>
      %84 = vector.extract_strided_slice %29 {offsets = [0, 5], sizes = [8, 1], strides = [1, 1]} : vector<8x8xf32> to vector<8x1xf32>
      %cst_23 = arith.constant 0.000000e+00 : f32
      %85 = vector.shape_cast %84 : vector<8x1xf32> to vector<8x1xf32>
      %86 = vector.broadcast %85 : vector<8x1xf32> to vector<8x128xf32>
      %87 = vector.broadcast %cst_23 : f32 to vector<8x128xf32>
      %88 = arith.select %83, %86, %87 : vector<8x128xi1>, vector<8x128xf32>
      %89 = arith.addf %80, %88 : vector<8x128xf32>
      %90 = vector.extract_strided_slice %27 {offsets = [0, 6], sizes = [8, 1], strides = [1, 1]} : vector<8x8xi32> to vector<8x1xi32>
      %91 = vector.broadcast %90 : vector<8x1xi32> to vector<8x128xi32>
      %92 = arith.cmpi eq, %91, %34 : vector<8x128xi32>
      %93 = vector.extract_strided_slice %29 {offsets = [0, 6], sizes = [8, 1], strides = [1, 1]} : vector<8x8xf32> to vector<8x1xf32>
      %cst_24 = arith.constant 0.000000e+00 : f32
      %94 = vector.shape_cast %93 : vector<8x1xf32> to vector<8x1xf32>
      %95 = vector.broadcast %94 : vector<8x1xf32> to vector<8x128xf32>
      %96 = vector.broadcast %cst_24 : f32 to vector<8x128xf32>
      %97 = arith.select %92, %95, %96 : vector<8x128xi1>, vector<8x128xf32>
      %98 = arith.addf %89, %97 : vector<8x128xf32>
      %99 = vector.extract_strided_slice %27 {offsets = [0, 7], sizes = [8, 1], strides = [1, 1]} : vector<8x8xi32> to vector<8x1xi32>
      %100 = vector.broadcast %99 : vector<8x1xi32> to vector<8x128xi32>
      %101 = arith.cmpi eq, %100, %34 : vector<8x128xi32>
      %102 = vector.extract_strided_slice %29 {offsets = [0, 7], sizes = [8, 1], strides = [1, 1]} : vector<8x8xf32> to vector<8x1xf32>
      %cst_25 = arith.constant 0.000000e+00 : f32
      %103 = vector.shape_cast %102 : vector<8x1xf32> to vector<8x1xf32>
      %104 = vector.broadcast %103 : vector<8x1xf32> to vector<8x128xf32>
      %105 = vector.broadcast %cst_25 : f32 to vector<8x128xf32>
      %106 = arith.select %101, %104, %105 : vector<8x128xi1>, vector<8x128xf32>
      %107 = arith.addf %98, %106 : vector<8x128xf32>
      %c0_26 = arith.constant 0 : index
      %c0_27 = arith.constant 0 : index
      %c0_28 = arith.constant 0 : index
      %108 = vector.load %arg6[%c0_26, %c0_27, %c0_28] : memref<2x128x128xf32, #tpu.memory_space<vmem>>, vector<1x128x128xf32>
      %109 = vector.shape_cast %108 : vector<1x128x128xf32> to vector<128x128xf32>
      %cst_29 = arith.constant dense<0.000000e+00> : vector<8x128xf32>
      %110 = tpu.matmul %107, %109, %cst_29 {dimension_numbers = #tpu.dot_dimension_numbers<[1], [0], [0], [1], [0, 0, 1, 1], [], []>} : vector<8x128xf32>, vector<128x128xf32>, vector<8x128xf32> -> vector<8x128xf32>
      %111 = arith.addf %30, %110 : vector<8x128xf32>
      %c0_30 = arith.constant 0 : index
      %c0_31 = arith.constant 0 : index
      %112 = vector.load %arg7[%c0_30, %c0_31] : memref<8x256xf32, #tpu.memory_space<vmem>>, vector<8x128xf32>
      %113 = arith.addf %112, %111 : vector<8x128xf32>
      %c0_32 = arith.constant 0 : index
      %c0_33 = arith.constant 0 : index
      %114 = vector.load %arg7[%c0_32, %c0_33] : memref<8x256xf32, #tpu.memory_space<vmem>>, vector<8x128xf32>
      tpu.vector_store %arg7[%c0_32, %c0_33], %113 {strides = array<i32>} : memref<8x256xf32, #tpu.memory_space<vmem>>, vector<8x128xf32>,
    } else {
    }
    %c2_i32_5 = arith.constant 2 : i32
    %15 = arith.muli %arg0, %c2_i32_5 : i32
    %c1_i32_6 = arith.constant 1 : i32
    %16 = arith.addi %15, %c1_i32_6 : i32
    %c1_i32_7 = arith.constant 1 : i32
    %17 = arith.muli %16, %c1_i32_7 : i32
    %18 = arith.addi %17, %arg1 : i32
    %c2_i32_8 = arith.constant 2 : i32
    %19 = arith.muli %18, %c2_i32_8 : i32
    %20 = arith.addi %19, %arg2 : i32
    %21 = arith.index_cast %20 : i32 to index
    %22 = memref.load %arg3[%21] : memref<8xi32, #tpu.memory_space<smem>>
    %c0_i32_9 = arith.constant 0 : i32
    %23 = arith.cmpi sgt, %22, %c0_i32_9 : i32
    %24 = arith.extui %23 : i1 to i32
    %c0_i32_10 = arith.constant 0 : i32
    %25 = arith.cmpi ne, %24, %c0_i32_10 : i32
    scf.if %25 {
      %c1 = arith.constant 1 : index
      %c0 = arith.constant 0 : index
      %c0_11 = arith.constant 0 : index
      %26 = vector.load %arg4[%c1, %c0, %c0_11] : memref<2x8x8xi32, #tpu.memory_space<vmem>>, vector<1x8x8xi32>
      %27 = vector.shape_cast %26 : vector<1x8x8xi32> to vector<8x8xi32>
      %c1_12 = arith.constant 1 : index
      %c0_13 = arith.constant 0 : index
      %c0_14 = arith.constant 0 : index
      %28 = vector.load %arg5[%c1_12, %c0_13, %c0_14] : memref<2x8x8xf32, #tpu.memory_space<vmem>>, vector<1x8x8xf32>
      %29 = vector.shape_cast %28 : vector<1x8x8xf32> to vector<8x8xf32>
      %cst = arith.constant 0.000000e+00 : f32
      %30 = vector.broadcast %cst : f32 to vector<8x128xf32>
      %31 = tpu.iota {dimensions = array<i32: 1>} : vector<8x128xi32>
      %c0_i32_15 = arith.constant 0 : i32
      %32 = arith.addi %3, %c0_i32_15 : i32
      %33 = vector.broadcast %32 : i32 to vector<8x128xi32>
      %34 = arith.addi %31, %33 : vector<8x128xi32>
      %cst_16 = arith.constant 0.000000e+00 : f32
      %35 = vector.broadcast %cst_16 : f32 to vector<8x128xf32>
      %36 = vector.extract_strided_slice %27 {offsets = [0, 0], sizes = [8, 1], strides = [1, 1]} : vector<8x8xi32> to vector<8x1xi32>
      %37 = vector.broadcast %36 : vector<8x1xi32> to vector<8x128xi32>
      %38 = arith.cmpi eq, %37, %34 : vector<8x128xi32>
      %39 = vector.extract_strided_slice %29 {offsets = [0, 0], sizes = [8, 1], strides = [1, 1]} : vector<8x8xf32> to vector<8x1xf32>
      %cst_17 = arith.constant 0.000000e+00 : f32
      %40 = vector.shape_cast %39 : vector<8x1xf32> to vector<8x1xf32>
      %41 = vector.broadcast %40 : vector<8x1xf32> to vector<8x128xf32>
      %42 = vector.broadcast %cst_17 : f32 to vector<8x128xf32>
      %43 = arith.select %38, %41, %42 : vector<8x128xi1>, vector<8x128xf32>
      %44 = arith.addf %35, %43 : vector<8x128xf32>
      %45 = vector.extract_strided_slice %27 {offsets = [0, 1], sizes = [8, 1], strides = [1, 1]} : vector<8x8xi32> to vector<8x1xi32>
      %46 = vector.broadcast %45 : vector<8x1xi32> to vector<8x128xi32>
      %47 = arith.cmpi eq, %46, %34 : vector<8x128xi32>
      %48 = vector.extract_strided_slice %29 {offsets = [0, 1], sizes = [8, 1], strides = [1, 1]} : vector<8x8xf32> to vector<8x1xf32>
      %cst_18 = arith.constant 0.000000e+00 : f32
      %49 = vector.shape_cast %48 : vector<8x1xf32> to vector<8x1xf32>
      %50 = vector.broadcast %49 : vector<8x1xf32> to vector<8x128xf32>
      %51 = vector.broadcast %cst_18 : f32 to vector<8x128xf32>
      %52 = arith.select %47, %50, %51 : vector<8x128xi1>, vector<8x128xf32>
      %53 = arith.addf %44, %52 : vector<8x128xf32>
      %54 = vector.extract_strided_slice %27 {offsets = [0, 2], sizes = [8, 1], strides = [1, 1]} : vector<8x8xi32> to vector<8x1xi32>
      %55 = vector.broadcast %54 : vector<8x1xi32> to vector<8x128xi32>
      %56 = arith.cmpi eq, %55, %34 : vector<8x128xi32>
      %57 = vector.extract_strided_slice %29 {offsets = [0, 2], sizes = [8, 1], strides = [1, 1]} : vector<8x8xf32> to vector<8x1xf32>
      %cst_19 = arith.constant 0.000000e+00 : f32
      %58 = vector.shape_cast %57 : vector<8x1xf32> to vector<8x1xf32>
      %59 = vector.broadcast %58 : vector<8x1xf32> to vector<8x128xf32>
      %60 = vector.broadcast %cst_19 : f32 to vector<8x128xf32>
      %61 = arith.select %56, %59, %60 : vector<8x128xi1>, vector<8x128xf32>
      %62 = arith.addf %53, %61 : vector<8x128xf32>
      %63 = vector.extract_strided_slice %27 {offsets = [0, 3], sizes = [8, 1], strides = [1, 1]} : vector<8x8xi32> to vector<8x1xi32>
      %64 = vector.broadcast %63 : vector<8x1xi32> to vector<8x128xi32>
      %65 = arith.cmpi eq, %64, %34 : vector<8x128xi32>
      %66 = vector.extract_strided_slice %29 {offsets = [0, 3], sizes = [8, 1], strides = [1, 1]} : vector<8x8xf32> to vector<8x1xf32>
      %cst_20 = arith.constant 0.000000e+00 : f32
      %67 = vector.shape_cast %66 : vector<8x1xf32> to vector<8x1xf32>
      %68 = vector.broadcast %67 : vector<8x1xf32> to vector<8x128xf32>
      %69 = vector.broadcast %cst_20 : f32 to vector<8x128xf32>
      %70 = arith.select %65, %68, %69 : vector<8x128xi1>, vector<8x128xf32>
      %71 = arith.addf %62, %70 : vector<8x128xf32>
      %72 = vector.extract_strided_slice %27 {offsets = [0, 4], sizes = [8, 1], strides = [1, 1]} : vector<8x8xi32> to vector<8x1xi32>
      %73 = vector.broadcast %72 : vector<8x1xi32> to vector<8x128xi32>
      %74 = arith.cmpi eq, %73, %34 : vector<8x128xi32>
      %75 = vector.extract_strided_slice %29 {offsets = [0, 4], sizes = [8, 1], strides = [1, 1]} : vector<8x8xf32> to vector<8x1xf32>
      %cst_21 = arith.constant 0.000000e+00 : f32
      %76 = vector.shape_cast %75 : vector<8x1xf32> to vector<8x1xf32>
      %77 = vector.broadcast %76 : vector<8x1xf32> to vector<8x128xf32>
      %78 = vector.broadcast %cst_21 : f32 to vector<8x128xf32>
      %79 = arith.select %74, %77, %78 : vector<8x128xi1>, vector<8x128xf32>
      %80 = arith.addf %71, %79 : vector<8x128xf32>
      %81 = vector.extract_strided_slice %27 {offsets = [0, 5], sizes = [8, 1], strides = [1, 1]} : vector<8x8xi32> to vector<8x1xi32>
      %82 = vector.broadcast %81 : vector<8x1xi32> to vector<8x128xi32>
      %83 = arith.cmpi eq, %82, %34 : vector<8x128xi32>
      %84 = vector.extract_strided_slice %29 {offsets = [0, 5], sizes = [8, 1], strides = [1, 1]} : vector<8x8xf32> to vector<8x1xf32>
      %cst_22 = arith.constant 0.000000e+00 : f32
      %85 = vector.shape_cast %84 : vector<8x1xf32> to vector<8x1xf32>
      %86 = vector.broadcast %85 : vector<8x1xf32> to vector<8x128xf32>
      %87 = vector.broadcast %cst_22 : f32 to vector<8x128xf32>
      %88 = arith.select %83, %86, %87 : vector<8x128xi1>, vector<8x128xf32>
      %89 = arith.addf %80, %88 : vector<8x128xf32>
      %90 = vector.extract_strided_slice %27 {offsets = [0, 6], sizes = [8, 1], strides = [1, 1]} : vector<8x8xi32> to vector<8x1xi32>
      %91 = vector.broadcast %90 : vector<8x1xi32> to vector<8x128xi32>
      %92 = arith.cmpi eq, %91, %34 : vector<8x128xi32>
      %93 = vector.extract_strided_slice %29 {offsets = [0, 6], sizes = [8, 1], strides = [1, 1]} : vector<8x8xf32> to vector<8x1xf32>
      %cst_23 = arith.constant 0.000000e+00 : f32
      %94 = vector.shape_cast %93 : vector<8x1xf32> to vector<8x1xf32>
      %95 = vector.broadcast %94 : vector<8x1xf32> to vector<8x128xf32>
      %96 = vector.broadcast %cst_23 : f32 to vector<8x128xf32>
      %97 = arith.select %92, %95, %96 : vector<8x128xi1>, vector<8x128xf32>
      %98 = arith.addf %89, %97 : vector<8x128xf32>
      %99 = vector.extract_strided_slice %27 {offsets = [0, 7], sizes = [8, 1], strides = [1, 1]} : vector<8x8xi32> to vector<8x1xi32>
      %100 = vector.broadcast %99 : vector<8x1xi32> to vector<8x128xi32>
      %101 = arith.cmpi eq, %100, %34 : vector<8x128xi32>
      %102 = vector.extract_strided_slice %29 {offsets = [0, 7], sizes = [8, 1], strides = [1, 1]} : vector<8x8xf32> to vector<8x1xf32>
      %cst_24 = arith.constant 0.000000e+00 : f32
      %103 = vector.shape_cast %102 : vector<8x1xf32> to vector<8x1xf32>
      %104 = vector.broadcast %103 : vector<8x1xf32> to vector<8x128xf32>
      %105 = vector.broadcast %cst_24 : f32 to vector<8x128xf32>
      %106 = arith.select %101, %104, %105 : vector<8x128xi1>, vector<8x128xf32>
      %107 = arith.addf %98, %106 : vector<8x128xf32>
      %c1_25 = arith.constant 1 : index
      %c0_26 = arith.constant 0 : index
      %c0_27 = arith.constant 0 : index
      %108 = vector.load %arg6[%c1_25, %c0_26, %c0_27] : memref<2x128x128xf32, #tpu.memory_space<vmem>>, vector<1x128x128xf32>
      %109 = vector.shape_cast %108 : vector<1x128x128xf32> to vector<128x128xf32>
      %cst_28 = arith.constant dense<0.000000e+00> : vector<8x128xf32>
      %110 = tpu.matmul %107, %109, %cst_28 {dimension_numbers = #tpu.dot_dimension_numbers<[1], [0], [0], [1], [0, 0, 1, 1], [], []>} : vector<8x128xf32>, vector<128x128xf32>, vector<8x128xf32> -> vector<8x128xf32>
      %111 = arith.addf %30, %110 : vector<8x128xf32>
      %c0_29 = arith.constant 0 : index
      %c128 = arith.constant 128 : index
      %112 = vector.load %arg7[%c0_29, %c128] : memref<8x256xf32, #tpu.memory_space<vmem>>, vector<8x128xf32>
      %113 = arith.addf %112, %111 : vector<8x128xf32>
      %c0_30 = arith.constant 0 : index
      %c128_31 = arith.constant 128 : index
      %114 = vector.load %arg7[%c0_30, %c128_31] : memref<8x256xf32, #tpu.memory_space<vmem>>, vector<8x128xf32>
      tpu.vector_store %arg7[%c0_30, %c128_31], %113 {strides = array<i32>} : memref<8x256xf32, #tpu.memory_space<vmem>>, vector<8x128xf32>,
    } else {
    }
    return
  }
  func.func @transform_0(%arg0: i32, %arg1: i32, %arg2: i32, %arg3: memref<8xi32, #tpu.memory_space<smem>>) -> (i32, i32, i32) {
    %c0_i32 = arith.constant 0 : i32
    %c0_i32_0 = arith.constant 0 : i32
    return %arg0, %arg1, %c0_i32 : i32, i32, i32
  }
  func.func @transform_1(%arg0: i32, %arg1: i32, %arg2: i32, %arg3: memref<8xi32, #tpu.memory_space<smem>>) -> (i32, i32, i32) {
    %c0_i32 = arith.constant 0 : i32
    %c0_i32_0 = arith.constant 0 : i32
    return %arg0, %arg1, %c0_i32 : i32, i32, i32
  }
  func.func @transform_2(%arg0: i32, %arg1: i32, %arg2: i32, %arg3: memref<8xi32, #tpu.memory_space<smem>>) -> (i32, i32, i32) {
    %c0_i32 = arith.constant 0 : i32
    %c0_i32_0 = arith.constant 0 : i32
    return %arg0, %arg2, %c0_i32 : i32, i32, i32
  }
  func.func @transform_3(%arg0: i32, %arg1: i32, %arg2: i32, %arg3: memref<8xi32, #tpu.memory_space<smem>>) -> (i32, i32) {
    %c0_i32 = arith.constant 0 : i32
    return %arg1, %arg0 : i32, i32
  }
}

</mosaic_0001>

<llo_original>
// kernel: tpu_custom_call.1
$region0: #{tpu_custom_call.1}
  #allocation0 [shape = 'u32[]', space=smem, size = 0x4, offset = 0x4, fixed_abs, tag = 'smem constant byte address 0x4 - core index']
  #allocation1 [shape = 'u32[72,128]{1,0:T(1,128)}', space=vmem, size = 0x9000, scoped, tag = 'internal scratch']
  #allocation2 [shape = 's32[1]{0}', space=sflag, size = 0x4, scoped, tag = 'scoped memory for tpu_custom_call.1']
  #allocation3 [shape = 'u8[512]{0}', space=smem, size = 0x200, scoped, tag = 'prefetched SMEM operand 0']
  #allocation11 [shape = 's32[]', space=sflag, size = 0x4, offset = 0, fixed_abs, tag = 'sflag constant byte address 0x0 - dummy sync flag']
  %s0 = inlined_call_operand.hbm [shape: s32[8], index: 0, kind: input, shape index: {}]
  %s1 = inlined_call_operand.hbm [shape: s32[4,8,8], index: 1, kind: input, shape index: {}]
  %s2 = inlined_call_operand.hbm [shape: f32[4,8,8], index: 2, kind: input, shape index: {}]
  %s3 = inlined_call_operand.hbm [shape: f32[4,256,128], index: 3, kind: input, shape index: {}]
  %s4 = inlined_call_operand.hbm [shape: f32[8,512], index: 4, kind: output, shape index: {}]
  %s5 = sld [smem:[#allocation0]]
  $region69: #{tpu_custom_call.1} parent=0
    _
  %s7 = ssub.s32 1, %s5
  %s8 = scalar_select 0, %s7, %s5
  %s10 = sshll.u32 %s0, 4
  %s11 = int_to_ptr.hbm [resolvable:$true] %s10
  %13 = dma.hbm_to_smem %s11, 16, [#allocation3], [#allocation2]
  %15 = dma.done [#allocation2], 16
  %16 = sfence
  $region1: #{tpu_custom_call.1} parent=0
    #allocation4 [shape = 'u8[16384]{0}', space=vmem, size = 0x4000, scoped, tag = 'input window, operand 1']
    #allocation5 [shape = 's32[2]{0}', space=sflag, size = 0x8, scoped, tag = 'scoped memory for tpu_custom_call.1']
    #allocation6 [shape = 's32[2]{0}', space=sflag, size = 0x8, scoped, tag = 'scoped memory for tpu_custom_call.1']
    #allocation7 [shape = 'u8[16384]{0}', space=vmem, size = 0x4000, scoped, tag = 'input window, operand 2']
    #allocation8 [shape = 's32[2]{0}', space=sflag, size = 0x8, scoped, tag = 'scoped memory for tpu_custom_call.1']
    #allocation9 [shape = 'u8[262144]{0}', space=vmem, size = 0x40000, scoped, tag = 'input window, operand 3']
    #allocation10 [shape = 'u8[16384]{0}', space=vmem, size = 0x4000, scoped, tag = 'output window, operand 0']
    %17 = vsyncpa [#allocation5], 0
    %s18 = scalar_lea.sflag [#allocation5], 1
    %19 = vsyncpa %s18, 0
    %20 = vsyncpa [#allocation8], 0
    %s21 = scalar_lea.sflag [#allocation8], 1
    %22 = vsyncpa %s21, 0
    %23 = vsyncpa [#allocation6], 0
    %s24 = scalar_lea.sflag [#allocation6], 1
    %25 = vsyncpa %s24, 0
    loop: start=0, step=1, limit=6
    $region2: #{tpu_custom_call.1} parent=1 // loop_pre_header
      _
    $region3: #{tpu_custom_call.1} parent=1 // loop_header
      %s27 = sphi 0, %s31
      %p28 = scmp.ge.s32.totalorder %s27, 6
      %s34 = sphi 0, %s53
      %s35 = sphi 0, %s49
      %s36 = sphi 0, %s45
      %s37 = sphi 0, %s34
      %s38 = sphi 0, %s35
      %s39 = sphi 0, %s36
      %s40 = sphi 0, %s37
      %s41 = sphi 0, %s38
      %s42 = sphi 0, %s39
      %s58 = sphi 0, %s60
      %s61 = sphi 0, %s58
      %s62 = sphi 0, %s61
      %s78 = sphi 0, %s62
      %s86 = sphi 0, %s88
      %s89 = sphi 0, %s86
      %s90 = sphi 0, %s89
      %s106 = sphi 0, %s90
      %s114 = sphi 0, %s116
      %s117 = sphi 0, %s114
      %s118 = sphi 0, %s117
      %s134 = sphi 0, %s118
      %s142 = sphi 0, %s144
      %s145 = sphi 0, %s142
      %s146 = sphi 0, %s145
      %s162 = sphi 0, %s146
    $region4: #{tpu_custom_call.1} parent=1 // loop_header_branch
      %30 = sbr.rel (%p28) target = $region8
    $region5: #{tpu_custom_call.1} parent=1 // loop_body
      %s32 = ssub.s32 %s27, 1
      %s33 = ssub.s32 %s27, 2
      %s43 = sadd.s32 1, %s36
      %p44 = scmp.ge.s32.totalorder %s43, 2
      %s45 = scalar_select %p44, 0, %s43
      %s46 = sadd.s32 1, %s35
      %s47 = scalar_select %p44, %s46, %s35
      %p48 = scmp.ge.s32.totalorder %s47, 1
      %s49 = scalar_select %p48, 0, %s47
      %s50 = sadd.s32 1, %s34
      %s51 = scalar_select %p48, %s50, %s34
      %p52 = scmp.ge.s32.totalorder %s51, 2
      %s53 = scalar_select %p52, 0, %s51
      %s54 = ssub.s32 %s34, %s53
      %s55 = ssub.s32 %s35, %s49
      %s56 = sor.u32 %s54, %s55
      %p57 = scmp.eq.s32.totalorder %s56, 0
      %s59 = sadd.s32 %s58, 1
      %s60 = scalar_select %p57, %s58, %s59
      %p63 = pneg %p57
      %p64 = scmp.eq.s32.totalorder %s27, 3
      %p65 = por %p63, %p64
      %p66 = scmp.ne.s32.totalorder %s58, %s61
      %p67 = scmp.eq.s32.totalorder %s27, 0
      %p68 = por %p66, %p67
      %p69 = scmp.ne.s32.totalorder %s58, %s61
      %p70 = scmp.eq.s32.totalorder %s32, 3
      %p71 = por %p69, %p70
      %p72 = scmp.ne.s32.totalorder %s61, %s62
      %p73 = scmp.eq.s32.totalorder %s32, 0
      %p74 = por %p72, %p73
      %p75 = scmp.ne.s32.totalorder %s61, %s62
      %p76 = scmp.eq.s32.totalorder %s33, 3
      %p77 = por %p75, %p76
      %p79 = scmp.ne.s32.totalorder %s62, %s78
      %p80 = scmp.eq.s32.totalorder %s33, 0
      %p81 = por %p79, %p80
      %s82 = ssub.s32 %s34, %s53
      %s83 = ssub.s32 %s35, %s49
      %s84 = sor.u32 %s82, %s83
      %p85 = scmp.eq.s32.totalorder %s84, 0
      %s87 = sadd.s32 %s86, 1
      %s88 = scalar_select %p85, %s86, %s87
      %p91 = pneg %p85
      %p92 = scmp.eq.s32.totalorder %s27, 3
      %p93 = por %p91, %p92
      %p94 = scmp.ne.s32.totalorder %s86, %s89
      %p95 = scmp.eq.s32.totalorder %s27, 0
      %p96 = por %p94, %p95
      %p97 = scmp.ne.s32.totalorder %s86, %s89
      %p98 = scmp.eq.s32.totalorder %s32, 3
      %p99 = por %p97, %p98
      %p100 = scmp.ne.s32.totalorder %s89, %s90
      %p101 = scmp.eq.s32.totalorder %s32, 0
      %p102 = por %p100, %p101
      %p103 = scmp.ne.s32.totalorder %s89, %s90
      %p104 = scmp.eq.s32.totalorder %s33, 3
      %p105 = por %p103, %p104
      %p107 = scmp.ne.s32.totalorder %s90, %s106
      %p108 = scmp.eq.s32.totalorder %s33, 0
      %p109 = por %p107, %p108
      %s110 = ssub.s32 %s34, %s53
      %s111 = ssub.s32 %s36, %s45
      %s112 = sor.u32 %s110, %s111
      %p113 = scmp.eq.s32.totalorder %s112, 0
      %s115 = sadd.s32 %s114, 1
      %s116 = scalar_select %p113, %s114, %s115
      %p119 = pneg %p113
      %p120 = scmp.eq.s32.totalorder %s27, 3
      %p121 = por %p119, %p120
      %p122 = scmp.ne.s32.totalorder %s114, %s117
      %p123 = scmp.eq.s32.totalorder %s27, 0
      %p124 = por %p122, %p123
      %p125 = scmp.ne.s32.totalorder %s114, %s117
      %p126 = scmp.eq.s32.totalorder %s32, 3
      %p127 = por %p125, %p126
      %p128 = scmp.ne.s32.totalorder %s117, %s118
      %p129 = scmp.eq.s32.totalorder %s32, 0
      %p130 = por %p128, %p129
      %p131 = scmp.ne.s32.totalorder %s117, %s118
      %p132 = scmp.eq.s32.totalorder %s33, 3
      %p133 = por %p131, %p132
      %p135 = scmp.ne.s32.totalorder %s118, %s134
      %p136 = scmp.eq.s32.totalorder %s33, 0
      %p137 = por %p135, %p136
      %s138 = ssub.s32 %s35, %s49
      %s139 = ssub.s32 %s34, %s53
      %s140 = sor.u32 %s138, %s139
      %p141 = scmp.eq.s32.totalorder %s140, 0
      %s143 = sadd.s32 %s142, 1
      %s144 = scalar_select %p141, %s142, %s143
      %p147 = pneg %p141
      %p148 = scmp.eq.s32.totalorder %s27, 3
      %p149 = por %p147, %p148
      %p150 = scmp.ne.s32.totalorder %s142, %s145
      %p151 = scmp.eq.s32.totalorder %s27, 0
      %p152 = por %p150, %p151
      %p153 = scmp.ne.s32.totalorder %s142, %s145
      %p154 = scmp.eq.s32.totalorder %s32, 3
      %p155 = por %p153, %p154
      %p156 = scmp.ne.s32.totalorder %s145, %s146
      %p157 = scmp.eq.s32.totalorder %s32, 0
      %p158 = por %p156, %p157
      %p159 = scmp.ne.s32.totalorder %s145, %s146
      %p160 = scmp.eq.s32.totalorder %s33, 3
      %p161 = por %p159, %p160
      %p163 = scmp.ne.s32.totalorder %s146, %s162
      %p164 = scmp.eq.s32.totalorder %s33, 0
      %p165 = por %p163, %p164
      %p166 = scmp.le.s32.totalorder 1, %s27
      %p167 = scmp.lt.s32.totalorder %s27, 5
      %p168 = pnand %p166, %p167
      %p169 = pneg %p168
      // Predicated region
      $region9: #{tpu_custom_call.1} parent=5 // pred_check
        _
      $region10: #{tpu_custom_call.1} parent=5 // pred_check_branch
        %171 = sbr.rel (%p168) target = $region12
      $region11: #{tpu_custom_call.1} parent=5 // pred_region
        %s172 = ssub.s32 %s27, 1
      $region12: #{tpu_custom_call.1} parent=5 // pred_fallthru
        _
      %p173 = scmp.lt.s32.totalorder %s27, 4
      // Predicated region
      $region13: #{tpu_custom_call.1} parent=5 // pred_check
        %p174 = pneg %p173
      $region14: #{tpu_custom_call.1} parent=5 // pred_check_branch
        %176 = sbr.rel (%p174) target = $region16
      $region15: #{tpu_custom_call.1} parent=5 // pred_region
        // Predicated region
        $region17: #{tpu_custom_call.1} parent=15 // pred_check
          %p177 = pneg %p68
        $region18: #{tpu_custom_call.1} parent=15 // pred_check_branch
          %179 = sbr.rel (%p177) target = $region20
        $region19: #{tpu_custom_call.1} parent=15 // pred_region
          %s180 = sand.u32 %s58, 1
          %s181 = scalar_lea.sflag [#allocation5], %s180
          %s182 = sand.u32 %s58, 1
          %s183 = smul.addr %s182, 16
          %s184 = scalar_lea.vmem [#allocation4], %s183
          %s185 = smul.u32 2, %s34
          %187 = vsyncadd %s181, 0
          %s188 = sadd.s32 %s35, %s185
          %s189 = smul.addr %s188, 8
          %s190 = scalar_lea.hbm %s1, %s189
          %s191 = sshll.u32 %s190, 4
          %s192 = int_to_ptr.hbm [resolvable:$true] %s191
          %s193 = sshll.u32 %s184, 4
          %s194 = int_to_ptr.vmem [resolvable:$true] %s193
          %199 = dma.hbm_to_vmem [thread:$0]  %s192, 256, %s194, %s181, 128, 128, 8
        $region20: #{tpu_custom_call.1} parent=15 // pred_fallthru
          _
        // Predicated region
        $region21: #{tpu_custom_call.1} parent=15 // pred_check
          %p200 = pneg %p96
        $region22: #{tpu_custom_call.1} parent=15 // pred_check_branch
          %202 = sbr.rel (%p200) target = $region24
        $region23: #{tpu_custom_call.1} parent=15 // pred_region
          %s203 = sand.u32 %s27, 1
          %s204 = scalar_lea.sflag [#allocation8], %s203
          %s205 = sand.u32 %s86, 1
          %s206 = smul.addr %s205, 16
          %s207 = scalar_lea.vmem [#allocation7], %s206
          %s208 = smul.u32 2, %s34
          %210 = vsyncadd %s204, 0
          %s211 = sadd.s32 %s35, %s208
          %s212 = smul.addr %s211, 8
          %s213 = scalar_lea.hbm %s2, %s212
          %s214 = sshll.u32 %s213, 4
          %s215 = int_to_ptr.hbm [resolvable:$true] %s214
          %s216 = sshll.u32 %s207, 4
          %s217 = int_to_ptr.vmem [resolvable:$true] %s216
          %222 = dma.hbm_to_vmem [thread:$0]  %s215, 256, %s217, %s204, 128, 128, 8
        $region24: #{tpu_custom_call.1} parent=15 // pred_fallthru
          _
        // Predicated region
        $region25: #{tpu_custom_call.1} parent=15 // pred_check
          %p223 = pneg %p124
        $region26: #{tpu_custom_call.1} parent=15 // pred_check_branch
          %225 = sbr.rel (%p223) target = $region28
        $region27: #{tpu_custom_call.1} parent=15 // pred_region
          #allocation12 [shape = 'u32[6]{0}', space=smem, size = 0x18, scoped, tag = 'DMA stride descriptor']
          %s226 = sand.u32 %s27, 1
          %s227 = scalar_lea.sflag [#allocation8], %s226
          %s228 = sand.u32 %s114, 1
          %s229 = smul.addr %s228, 256
          %s230 = scalar_lea.vmem [#allocation9], %s229
          %s231 = smul.u32 2, %s34
          %s232 = smul.u32 16, %s36
          %234 = vsyncadd %s227, 0
          %s235 = smul.addr %s231, 32
          %s236 = sadd.s32 %s232, %s235
          %s237 = smul.addr %s236, 8
          %s238 = scalar_lea.hbm %s3, %s237
          %s240 = sshll.u32 1, 14
          %s241 = sxor.u32 4294967295, %s240
          %s243 = sld [smem:[#allocation0]]
          %s244 = sadd.s32 2, %s243
          %s246 = sshll.u32 7, 26
          %s247 = sxor.u32 4294967295, %s246
          %s248 = sand.u32 0, %s247
          %s249 = sshll.u32 %s244, 26
          %s250 = sor.u32 %s248, %s249
          %s251 = sshll.u32 %s238, 4
          %s252 = int_to_ptr.hbm [resolvable:$true] %s251
          %s253 = sshll.u32 %s230, 4
          %s254 = int_to_ptr.vmem [resolvable:$true] %s253
          %260 = sst [smem:[#allocation12]] 4096
          %s261 = scalar_lea.smem [#allocation12], 1
          %262 = sst [smem:[%s261]] 2048
          %s263 = scalar_lea.smem [#allocation12], 2
          %264 = sst [smem:[%s263]] 16
          %s265 = scalar_lea.smem [#allocation12], 3
          %266 = sst [smem:[%s265]] 128
          %s267 = scalar_lea.smem [#allocation12], 4
          %268 = sst [smem:[%s267]] 128
          %s269 = scalar_lea.smem [#allocation12], 5
          %270 = sst [smem:[%s269]] 8
          %272 = dma.general %s252, 4096, %s254, %s227, [#allocation11], [#allocation12], %s250, 0
        $region28: #{tpu_custom_call.1} parent=15 // pred_fallthru
          _
      $region16: #{tpu_custom_call.1} parent=5 // pred_fallthru
        _
      %p273 = scmp.le.s32.totalorder 1, %s27
      %p274 = scmp.lt.s32.totalorder %s27, 5
      %p275 = pnand %p273, %p274
      %p276 = pneg %p275
      // Predicated region
      $region29: #{tpu_custom_call.1} parent=5 // pred_check
        _
      $region30: #{tpu_custom_call.1} parent=5 // pred_check_branch
        %278 = sbr.rel (%p275) target = $region32
      $region31: #{tpu_custom_call.1} parent=5 // pred_region
        %s279 = ssub.s32 %s27, 1
        %s280 = sand.u32 %s61, 1
        %s281 = scalar_lea.sflag [#allocation5], %s280
        %s282 = sand.u32 %s61, 1
        %s283 = smul.addr %s282, 16
        %s284 = scalar_lea.vmem [#allocation4], %s283
        // Predicated region
        $region33: #{tpu_custom_call.1} parent=31 // pred_check
          %p285 = pneg %p74
        $region34: #{tpu_custom_call.1} parent=31 // pred_check_branch
          %287 = sbr.rel (%p285) target = $region36
        $region35: #{tpu_custom_call.1} parent=31 // pred_region
          %289 = dma.done %s281, 256
        $region36: #{tpu_custom_call.1} parent=31 // pred_fallthru
          _
        %s290 = sand.u32 %s32, 1
        %s291 = scalar_lea.sflag [#allocation8], %s290
        %s292 = sand.u32 %s89, 1
        %s293 = smul.addr %s292, 16
        %s294 = scalar_lea.vmem [#allocation7], %s293
        // Predicated region
        $region37: #{tpu_custom_call.1} parent=31 // pred_check
          %p295 = pneg %p102
        $region38: #{tpu_custom_call.1} parent=31 // pred_check_branch
          %297 = sbr.rel (%p295) target = $region40
        $region39: #{tpu_custom_call.1} parent=31 // pred_region
          %299 = dma.done %s291, 256
        $region40: #{tpu_custom_call.1} parent=31 // pred_fallthru
          _
        %s300 = sand.u32 %s32, 1
        %s301 = scalar_lea.sflag [#allocation8], %s300
        %s302 = sand.u32 %s117, 1
        %s303 = smul.addr %s302, 256
        %s304 = scalar_lea.vmem [#allocation9], %s303
        // Predicated region
        $region41: #{tpu_custom_call.1} parent=31 // pred_check
          %p305 = pneg %p130
        $region42: #{tpu_custom_call.1} parent=31 // pred_check_branch
          %307 = sbr.rel (%p305) target = $region44
        $region43: #{tpu_custom_call.1} parent=31 // pred_region
          %309 = dma.done %s301, 4096
        $region44: #{tpu_custom_call.1} parent=31 // pred_fallthru
          _
        %s310 = sand.u32 %s61, 1
        %s311 = scalar_lea.sflag [#allocation5], %s310
        %s312 = sand.u32 %s61, 1
        %s313 = smul.addr %s312, 16
        %s314 = scalar_lea.vmem [#allocation4], %s313
        %p315 = pneg %p74
        %p316 = pneg %p71
        %s317 = sand.u32 %s32, 1
        %s318 = scalar_lea.sflag [#allocation8], %s317
        %s319 = sand.u32 %s89, 1
        %s320 = smul.addr %s319, 16
        %s321 = scalar_lea.vmem [#allocation7], %s320
        %p322 = pneg %p102
        %p323 = pneg %p99
        %s324 = sand.u32 %s32, 1
        %s325 = scalar_lea.sflag [#allocation8], %s324
        %s326 = sand.u32 %s117, 1
        %s327 = smul.addr %s326, 256
        %s328 = scalar_lea.vmem [#allocation9], %s327
        %p329 = pneg %p130
        %p330 = pneg %p127
        %p331 = pneg %p158
        %p332 = pneg %p155
        %s333 = sand.u32 %s145, 1
        %s334 = scalar_lea.sflag [#allocation6], %s333
        %s335 = sand.u32 %s145, 1
        %s336 = smul.addr %s335, 16
        %s337 = scalar_lea.vmem [#allocation10], %s336
        %s338 = smul.u32 2, %s37
        %s339 = smul.u32 2, %s37
        %s340 = smul.u32 2, %s37
        %s341 = smul.u32 16, %s39
        %s342 = smul.u32 2, %s37
        %p343 = scmp.eq.s32.totalorder %s39, 0
        // Predicated region
        $region45: #{tpu_custom_call.1} parent=31 // pred_check
          %p344 = pneg %p343
        $region46: #{tpu_custom_call.1} parent=31 // pred_check_branch
          %346 = sbr.rel (%p344) target = $region48
        $region47: #{tpu_custom_call.1} parent=31 // pred_region
          %347 = vst [vmem:[%s337] sm:$0xff] 0.0
          %348 = vst [vmem:[%s337 + $0x8] sm:$0xff] 0.0
        $region48: #{tpu_custom_call.1} parent=31 // pred_fallthru
          _
        %s349 = smul.u32 %s39, 128
        %s350 = smul.u32 %s37, 2
        %s351 = sadd.s32 %s350, %s38
        %s352 = smul.u32 %s351, 2
        %s353 = sadd.s32 %s352, %s39
        %s354 = sld [smem:[#allocation3 + %s353]]
        %p355 = scmp.gt.s32.totalorder %s354, 0
        // Predicated region
        $region49: #{tpu_custom_call.1} parent=31 // pred_check
          %p356 = pneg %p355
        $region50: #{tpu_custom_call.1} parent=31 // pred_check_branch
          %358 = sbr.rel (%p356) target = $region52
        $region51: #{tpu_custom_call.1} parent=31 // pred_region
          %v359 = vld [vmem:[%s284] sm:$0xff]
          %v360 = vld [vmem:[%s294] sm:$0xff]
          %v361 = vlaneseq
          %v362 = vand.u32 %v361, 127
          %v363 = vstv %s349
          %v364 = vadd.s32 %v362, %v363
          %365 = vset.pattern.permute.xlu0 0
          %366 = vperm.xlu0 %365, %v359
          %v367 = vpop.permute.xlu0 %366
          %vm368 = vcmp.eq.s32.totalorder %v367, %v364
          %370 = vset.pattern.permute.xlu0 0
          %371 = vperm.xlu0 %370, %v360
          %v372 = vpop.permute.xlu0 %371
          %v374 = vsel %vm368, %v372, 0.0
          %v375 = vadd.f32 %v374, 0.0
          %376 = vset.pattern.permute.xlu0 1
          %377 = vperm.xlu0 %376, %v359
          %v378 = vpop.permute.xlu0 %377
          %vm379 = vcmp.eq.s32.totalorder %v378, %v364
          %380 = vset.pattern.permute.xlu0 1
          %381 = vperm.xlu0 %380, %v360
          %v382 = vpop.permute.xlu0 %381
          %v384 = vsel %vm379, %v382, 0.0
          %v385 = vadd.f32 %v375, %v384
          %386 = vset.pattern.permute.xlu0 2
          %387 = vperm.xlu0 %386, %v359
          %v388 = vpop.permute.xlu0 %387
          %vm389 = vcmp.eq.s32.totalorder %v388, %v364
          %390 = vset.pattern.permute.xlu0 2
          %391 = vperm.xlu0 %390, %v360
          %v392 = vpop.permute.xlu0 %391
          %v394 = vsel %vm389, %v392, 0.0
          %v395 = vadd.f32 %v385, %v394
          %396 = vset.pattern.permute.xlu0 3
          %397 = vperm.xlu0 %396, %v359
          %v398 = vpop.permute.xlu0 %397
          %vm399 = vcmp.eq.s32.totalorder %v398, %v364
          %400 = vset.pattern.permute.xlu0 3
          %401 = vperm.xlu0 %400, %v360
          %v402 = vpop.permute.xlu0 %401
          %v404 = vsel %vm399, %v402, 0.0
          %v405 = vadd.f32 %v395, %v404
          %406 = vset.pattern.permute.xlu0 4
          %407 = vperm.xlu0 %406, %v359
          %v408 = vpop.permute.xlu0 %407
          %vm409 = vcmp.eq.s32.totalorder %v408, %v364
          %410 = vset.pattern.permute.xlu0 4
          %411 = vperm.xlu0 %410, %v360
          %v412 = vpop.permute.xlu0 %411
          %v414 = vsel %vm409, %v412, 0.0
          %v415 = vadd.f32 %v405, %v414
          %416 = vset.pattern.permute.xlu0 5
          %417 = vperm.xlu0 %416, %v359
          %v418 = vpop.permute.xlu0 %417
          %vm419 = vcmp.eq.s32.totalorder %v418, %v364
          %420 = vset.pattern.permute.xlu0 5
          %421 = vperm.xlu0 %420, %v360
          %v422 = vpop.permute.xlu0 %421
          %v424 = vsel %vm419, %v422, 0.0
          %v425 = vadd.f32 %v415, %v424
          %426 = vset.pattern.permute.xlu0 6
          %427 = vperm.xlu0 %426, %v359
          %v428 = vpop.permute.xlu0 %427
          %vm429 = vcmp.eq.s32.totalorder %v428, %v364
          %430 = vset.pattern.permute.xlu0 6
          %431 = vperm.xlu0 %430, %v360
          %v432 = vpop.permute.xlu0 %431
          %v434 = vsel %vm429, %v432, 0.0
          %v435 = vadd.f32 %v425, %v434
          %436 = vset.pattern.permute.xlu0 7
          %437 = vperm.xlu0 %436, %v359
          %v438 = vpop.permute.xlu0 %437
          %vm439 = vcmp.eq.s32.totalorder %v438, %v364
          %440 = vset.pattern.permute.xlu0 7
          %441 = vperm.xlu0 %440, %v360
          %v442 = vpop.permute.xlu0 %441
          %v444 = vsel %vm439, %v442, 0.0
          %v445 = vadd.f32 %v435, %v444
          %v446 = vld [vmem:[%s304] sm:$0xff]
          %v447 = vld [vmem:[%s304 + $0x8] sm:$0xff]
          %v448 = vld [vmem:[%s304 + $0x10] sm:$0xff]
          %v449 = vld [vmem:[%s304 + $0x18] sm:$0xff]
          %v450 = vld [vmem:[%s304 + $0x20] sm:$0xff]
          %v451 = vld [vmem:[%s304 + $0x28] sm:$0xff]
          %v452 = vld [vmem:[%s304 + $0x30] sm:$0xff]
          %v453 = vld [vmem:[%s304 + $0x38] sm:$0xff]
          %v454 = vld [vmem:[%s304 + $0x40] sm:$0xff]
          %v455 = vld [vmem:[%s304 + $0x48] sm:$0xff]
          %v456 = vld [vmem:[%s304 + $0x50] sm:$0xff]
          %v457 = vld [vmem:[%s304 + $0x58] sm:$0xff]
          %v458 = vld [vmem:[%s304 + $0x60] sm:$0xff]
          %v459 = vld [vmem:[%s304 + $0x68] sm:$0xff]
          %v460 = vld [vmem:[%s304 + $0x70] sm:$0xff]
          %v461 = vld [vmem:[%s304 + $0x78] sm:$0xff]
          %462 = vmatpush.msra.mxu0 %v461
          %463 = vmatpush.msra.mxu0 %v460
          %464 = vmatpush.msra.mxu0 %v459
          %465 = vmatpush.msra.mxu0 %v458
          %466 = vmatpush.msra.mxu0 %v457
          %467 = vmatpush.msra.mxu0 %v456
          %468 = vmatpush.msra.mxu0 %v455
          %469 = vmatpush.msra.mxu0 %v454
          %470 = vmatpush.msra.mxu0 %v453
          %471 = vmatpush.msra.mxu0 %v452
          %472 = vmatpush.msra.mxu0 %v451
          %473 = vmatpush.msra.mxu0 %v450
          %474 = vmatpush.msra.mxu0 %v449
          %475 = vmatpush.msra.mxu0 %v448
          %476 = vmatpush.msra.mxu0 %v447
          %477 = vmatpush.msra.mxu0 %v446
          %478 = vmatmul.f32.gmra.mxu0 %v445
          %v479 = vpop.f32.mrf.mxu0
          %v480 = vadd.f32 0.0, %v479
          %481 = vdwg.mxu0
          %v482 = vld [vmem:[%s337] sm:$0xff]
          %v483 = vadd.f32 %v482, %v480
          %484 = vst [vmem:[%s337] sm:$0xff] %v483
        $region52: #{tpu_custom_call.1} parent=31 // pred_fallthru
          _
        %s485 = sadd.s32 %s350, 1
        %s486 = sadd.s32 %s485, %s38
        %s487 = smul.u32 %s486, 2
        %s488 = sadd.s32 %s487, %s39
        %s489 = sld [smem:[#allocation3 + %s488]]
        %p490 = scmp.gt.s32.totalorder %s489, 0
        // Predicated region
        $region53: #{tpu_custom_call.1} parent=31 // pred_check
          %p491 = pneg %p490
        $region54: #{tpu_custom_call.1} parent=31 // pred_check_branch
          %493 = sbr.rel (%p491) target = $region56
        $region55: #{tpu_custom_call.1} parent=31 // pred_region
          %s494 = scalar_lea.vmem %s284, 8 [#allocation4]
          %v495 = vld [vmem:[%s494] sm:$0xff]
          %s496 = scalar_lea.vmem %s294, 8 [#allocation7]
          %v497 = vld [vmem:[%s496] sm:$0xff]
          %v498 = vlaneseq
          %v499 = vand.u32 %v498, 127
          %v500 = vstv %s349
          %v501 = vadd.s32 %v499, %v500
          %502 = vset.pattern.permute.xlu0 0
          %503 = vperm.xlu0 %502, %v495
          %v504 = vpop.permute.xlu0 %503
          %vm505 = vcmp.eq.s32.totalorder %v504, %v501
          %507 = vset.pattern.permute.xlu0 0
          %508 = vperm.xlu0 %507, %v497
          %v509 = vpop.permute.xlu0 %508
          %v511 = vsel %vm505, %v509, 0.0
          %v512 = vadd.f32 %v511, 0.0
          %513 = vset.pattern.permute.xlu0 1
          %514 = vperm.xlu0 %513, %v495
          %v515 = vpop.permute.xlu0 %514
          %vm516 = vcmp.eq.s32.totalorder %v515, %v501
          %517 = vset.pattern.permute.xlu0 1
          %518 = vperm.xlu0 %517, %v497
          %v519 = vpop.permute.xlu0 %518
          %v521 = vsel %vm516, %v519, 0.0
          %v522 = vadd.f32 %v512, %v521
          %523 = vset.pattern.permute.xlu0 2
          %524 = vperm.xlu0 %523, %v495
          %v525 = vpop.permute.xlu0 %524
          %vm526 = vcmp.eq.s32.totalorder %v525, %v501
          %527 = vset.pattern.permute.xlu0 2
          %528 = vperm.xlu0 %527, %v497
          %v529 = vpop.permute.xlu0 %528
          %v531 = vsel %vm526, %v529, 0.0
          %v532 = vadd.f32 %v522, %v531
          %533 = vset.pattern.permute.xlu0 3
          %534 = vperm.xlu0 %533, %v495
          %v535 = vpop.permute.xlu0 %534
          %vm536 = vcmp.eq.s32.totalorder %v535, %v501
          %537 = vset.pattern.permute.xlu0 3
          %538 = vperm.xlu0 %537, %v497
          %v539 = vpop.permute.xlu0 %538
          %v541 = vsel %vm536, %v539, 0.0
          %v542 = vadd.f32 %v532, %v541
          %543 = vset.pattern.permute.xlu0 4
          %544 = vperm.xlu0 %543, %v495
          %v545 = vpop.permute.xlu0 %544
          %vm546 = vcmp.eq.s32.totalorder %v545, %v501
          %547 = vset.pattern.permute.xlu0 4
          %548 = vperm.xlu0 %547, %v497
          %v549 = vpop.permute.xlu0 %548
          %v551 = vsel %vm546, %v549, 0.0
          %v552 = vadd.f32 %v542, %v551
          %553 = vset.pattern.permute.xlu0 5
          %554 = vperm.xlu0 %553, %v495
          %v555 = vpop.permute.xlu0 %554
          %vm556 = vcmp.eq.s32.totalorder %v555, %v501
          %557 = vset.pattern.permute.xlu0 5
          %558 = vperm.xlu0 %557, %v497
          %v559 = vpop.permute.xlu0 %558
          %v561 = vsel %vm556, %v559, 0.0
          %v562 = vadd.f32 %v552, %v561
          %563 = vset.pattern.permute.xlu0 6
          %564 = vperm.xlu0 %563, %v495
          %v565 = vpop.permute.xlu0 %564
          %vm566 = vcmp.eq.s32.totalorder %v565, %v501
          %567 = vset.pattern.permute.xlu0 6
          %568 = vperm.xlu0 %567, %v497
          %v569 = vpop.permute.xlu0 %568
          %v571 = vsel %vm566, %v569, 0.0
          %v572 = vadd.f32 %v562, %v571
          %573 = vset.pattern.permute.xlu0 7
          %574 = vperm.xlu0 %573, %v495
          %v575 = vpop.permute.xlu0 %574
          %vm576 = vcmp.eq.s32.totalorder %v575, %v501
          %577 = vset.pattern.permute.xlu0 7
          %578 = vperm.xlu0 %577, %v497
          %v579 = vpop.permute.xlu0 %578
          %v581 = vsel %vm576, %v579, 0.0
          %v582 = vadd.f32 %v572, %v581
          %s583 = scalar_lea.vmem %s304, 128 [#allocation9]
          %v584 = vld [vmem:[%s583] sm:$0xff]
          %v585 = vld [vmem:[%s583 + $0x8] sm:$0xff]
          %v586 = vld [vmem:[%s583 + $0x10] sm:$0xff]
          %v587 = vld [vmem:[%s583 + $0x18] sm:$0xff]
          %v588 = vld [vmem:[%s583 + $0x20] sm:$0xff]
          %v589 = vld [vmem:[%s583 + $0x28] sm:$0xff]
          %v590 = vld [vmem:[%s583 + $0x30] sm:$0xff]
          %v591 = vld [vmem:[%s583 + $0x38] sm:$0xff]
          %v592 = vld [vmem:[%s583 + $0x40] sm:$0xff]
          %v593 = vld [vmem:[%s583 + $0x48] sm:$0xff]
          %v594 = vld [vmem:[%s583 + $0x50] sm:$0xff]
          %v595 = vld [vmem:[%s583 + $0x58] sm:$0xff]
          %v596 = vld [vmem:[%s583 + $0x60] sm:$0xff]
          %v597 = vld [vmem:[%s583 + $0x68] sm:$0xff]
          %v598 = vld [vmem:[%s583 + $0x70] sm:$0xff]
          %v599 = vld [vmem:[%s583 + $0x78] sm:$0xff]
          %600 = vmatpush.msra.mxu0 %v599
          %601 = vmatpush.msra.mxu0 %v598
          %602 = vmatpush.msra.mxu0 %v597
          %603 = vmatpush.msra.mxu0 %v596
          %604 = vmatpush.msra.mxu0 %v595
          %605 = vmatpush.msra.mxu0 %v594
          %606 = vmatpush.msra.mxu0 %v593
          %607 = vmatpush.msra.mxu0 %v592
          %608 = vmatpush.msra.mxu0 %v591
          %609 = vmatpush.msra.mxu0 %v590
          %610 = vmatpush.msra.mxu0 %v589
          %611 = vmatpush.msra.mxu0 %v588
          %612 = vmatpush.msra.mxu0 %v587
          %613 = vmatpush.msra.mxu0 %v586
          %614 = vmatpush.msra.mxu0 %v585
          %615 = vmatpush.msra.mxu0 %v584
          %616 = vmatmul.f32.gmra.mxu0 %v582
          %v617 = vpop.f32.mrf.mxu0
          %v618 = vadd.f32 0.0, %v617
          %619 = vdwg.mxu0
          %v620 = vld [vmem:[%s337 + $0x8] sm:$0xff]
          %v621 = vadd.f32 %v620, %v618
          %622 = vst [vmem:[%s337 + $0x8] sm:$0xff] %v621
        $region56: #{tpu_custom_call.1} parent=31 // pred_fallthru
          _
        %s623 = sand.u32 %s145, 1
        %s624 = scalar_lea.sflag [#allocation6], %s623
        %s625 = sand.u32 %s145, 1
        %s626 = smul.addr %s625, 16
        %s627 = scalar_lea.vmem [#allocation10], %s626
        // Predicated region
        $region57: #{tpu_custom_call.1} parent=31 // pred_check
          %p628 = pneg %p155
        $region58: #{tpu_custom_call.1} parent=31 // pred_check_branch
          %630 = sbr.rel (%p628) target = $region60
        $region59: #{tpu_custom_call.1} parent=31 // pred_region
          %s631 = smul.u32 2, %s37
          %633 = vsyncadd %s624, 0
          %s634 = smul.addr %s38, 4
          %s635 = sadd.s32 %s631, %s634
          %s636 = smul.addr %s635, 8
          %s637 = scalar_lea.hbm %s4, %s636
          %s639 = sshll.u32 %s627, 4
          %s640 = int_to_ptr.vmem [resolvable:$true] %s639
          %s641 = sshll.u32 %s637, 4
          %s642 = int_to_ptr.hbm [resolvable:$true] %s641
          %644 = dma.vmem_to_hbm [thread:$0]  %s640, 256, %s642, %s624
        $region60: #{tpu_custom_call.1} parent=31 // pred_fallthru
          _
      $region32: #{tpu_custom_call.1} parent=5 // pred_fallthru
        _
      %p645 = scmp.le.s32.totalorder 2, %s27
      // Predicated region
      $region61: #{tpu_custom_call.1} parent=5 // pred_check
        %p646 = pneg %p645
      $region62: #{tpu_custom_call.1} parent=5 // pred_check_branch
        %648 = sbr.rel (%p646) target = $region64
      $region63: #{tpu_custom_call.1} parent=5 // pred_region
        %s649 = ssub.s32 %s27, 2
        // Predicated region
        $region65: #{tpu_custom_call.1} parent=63 // pred_check
          %p650 = pneg %p161
        $region66: #{tpu_custom_call.1} parent=63 // pred_check_branch
          %652 = sbr.rel (%p650) target = $region68
        $region67: #{tpu_custom_call.1} parent=63 // pred_region
          %s653 = sand.u32 %s146, 1
          %s654 = scalar_lea.sflag [#allocation6], %s653
          %s655 = sand.u32 %s146, 1
          %s656 = smul.addr %s655, 16
          %s657 = scalar_lea.vmem [#allocation10], %s656
          %659 = dma.done %s654, 256
        $region68: #{tpu_custom_call.1} parent=63 // pred_fallthru
          _
      $region64: #{tpu_custom_call.1} parent=5 // pred_fallthru
        _
    $region6: #{tpu_custom_call.1} parent=1 // loop_footer
      %s31 = sadd.s32 1, %s27
    $region7: #{tpu_custom_call.1} parent=1 // loop_footer_branch
      %26 = sbr.rel target = $region3
    $region8: #{tpu_custom_call.1} parent=1 // loop_exit
      _
    %660 = vsyncpa [#allocation5], 1
    %s661 = scalar_lea.sflag [#allocation5], 1
    %662 = vsyncpa %s661, 1
    %663 = vsyncpa [#allocation8], 1
    %s664 = scalar_lea.sflag [#allocation8], 1
    %665 = vsyncpa %s664, 1
    %666 = vsyncpa [#allocation6], 1
    %s667 = scalar_lea.sflag [#allocation6], 1
    %668 = vsyncpa %s667, 1

</llo_original>
